<compile_context>
chip_gen: v6e
topology: v6e:2x2x1
jax: 0.10.0
libtpu: 0.0.40
codegen_flags: <defaults>
</compile_context>

<pallas_src>
import functools

import jax
import jax.numpy as jnp
from jax import lax
from jax.experimental import pallas as pl
from jax.experimental.pallas import tpu as pltpu


# ------------------------------- Pallas kernel -------------------------------

def _gradient_step_kernel(mu_ref, x_ref, x0_ref, h_ref, o_ref, *, mxu_dtype):
    x0 = x0_ref[...]                       # (rows, N) f32
    h = h_ref[...]                         # (M, N)    f32, resident across grid
    h_mxu = h.astype(mxu_dtype)

    # Residual in measurement space: r = x0 @ H^T - x   (rows, M)
    # (contract both operands on their N axis; H^T is never materialized)
    r = lax.dot_general(
        x0.astype(mxu_dtype), h_mxu,
        dimension_numbers=(((1,), (1,)), ((), ())),
        preferred_element_type=jnp.float32) - x_ref[...]

    # Gradient step: out = x0 - (mu * r) @ H            (rows, N)
    # mu applied on the (rows, M) residual -> cheaper than scaling (rows, N).
    scaled_r = mu_ref[0] * r
    o_ref[...] = x0 - jnp.dot(scaled_r.astype(mxu_dtype), h_mxu,
                              preferred_element_type=jnp.float32)


# ------------------------------- wrapper --------------------------------------

def _round_up(a, b):
    return (a + b - 1) // b * b


@functools.partial(jax.jit, static_argnames=("block_rows", "use_bf16_mxu"))
def gradient_step(x, x0, H, mu, *, block_rows=512, use_bf16_mxu=False):
    """out = x0 - mu * ((x0 @ H.T - x) @ H), fused in a single Pallas kernel.

    x  : (BC, M) measurement vectors
    x0 : (BC, N) previous estimates
    H  : (M, N)  acquisition matrix
    mu : scalar (learnable parameter)
    """
    BC, M = x.shape
    BC2, N = x0.shape
    assert BC == BC2 and H.shape == (M, N)

    x = x.astype(jnp.float32)
    x0 = x0.astype(jnp.float32)
    H = H.astype(jnp.float32)

    # Row-tile selection:
    #   * never larger than `block_rows` (256-512 keeps the MXU rows full),
    #   * aim for >= 2 row blocks when the batch allows it, so the "parallel"
    #     grid axis shards across both TensorCores on v7x,
    #   * always a multiple of 8 sublanes.
    half_rows = _round_up(max((BC + 1) // 2, 1), 8)
    br = max(8, min(block_rows, half_rows))
    rows = _round_up(BC, br)
    pad = rows - BC
    if pad:  # zero rows flow through as zeros and are sliced off at the end
        x = jnp.pad(x, ((0, pad), (0, 0)))
        x0 = jnp.pad(x0, ((0, pad), (0, 0)))

    mu_arr = jnp.asarray(mu, jnp.float32).reshape((1,))
    mxu_dtype = jnp.bfloat16 if use_bf16_mxu else jnp.float32

    # VMEM budget: double-buffered row tiles (x, x0, out) + resident H
    # (double-buffered by default) + headroom, capped at v7x's 64 MiB physical.
    tile_bytes = 4 * br * (M + 2 * N)
    op_bytes = 4 * M * N
    vmem_budget = int(min(max(2 * tile_bytes + 2 * op_bytes + (4 << 20),
                              32 << 20),
                          64 << 20))

    out = pl.pallas_call(
        functools.partial(_gradient_step_kernel, mxu_dtype=mxu_dtype),
        out_shape=jax.ShapeDtypeStruct((rows, N), jnp.float32),
        grid=(rows // br,),
        in_specs=[
            pl.BlockSpec(memory_space=pltpu.MemorySpace.SMEM),   # mu (scalar)
            pl.BlockSpec((br, M), lambda i: (i, 0)),             # x
            pl.BlockSpec((br, N), lambda i: (i, 0)),             # x0
            pl.BlockSpec((M, N), lambda i: (0, 0)),              # H (resident)
        ],
        out_specs=pl.BlockSpec((br, N), lambda i: (i, 0)),
        compiler_params=pltpu.CompilerParams(
            dimension_semantics=("parallel",),
            vmem_limit_bytes=vmem_budget),
    )(mu_arr, x, x0, H)

    return out[:BC]


# ------------------------------- main ------------------------------------------

if __name__ == "__main__":
    # Shapes implied by gradient_step.forward: x (b*c, M), x_0 (b*c, N).
    b, c, h, w = 2, 4, 16, 16
    BC, N, M = b * c, h * w, 128           # BC = 8 rows, N = 256 pixels, M = 128 meas.
    mu = 0.1

    key = jax.random.PRNGKey(0)
    kx, k0, kh = jax.random.split(key, 3)
    x = jax.random.normal(kx, (BC, M), jnp.float32)              # measurements
    x0 = jax.random.normal(k0, (BC, N), jnp.float32)             # previous estimate
    H = jax.random.normal(kh, (M, N), jnp.float32) / jnp.sqrt(N)

    out = gradient_step(x, x0, H, mu)
    jax.block_until_ready(out)

    # pure-JAX reference (same semantics as the PyTorch module)
    ref = x0 - mu * ((x0 @ H.T - x) @ H)

    assert out.shape == (BC, N) and out.dtype == jnp.float32
    assert jnp.allclose(out, ref, rtol=1e-4, atol=1e-4)
    print("KERNEL_OK")
</pallas_src>

<mosaic_0001>
module attributes {stable_mosaic.version = 11 : i64} {
  func.func @_gradient_step_kernel(%arg0: i32, %arg1: memref<1xf32, #tpu.memory_space<smem>>, %arg2: memref<8x128xf32, #tpu.memory_space<vmem>>, %arg3: memref<8x256xf32, #tpu.memory_space<vmem>>, %arg4: memref<128x256xf32, #tpu.memory_space<vmem>>, %arg5: memref<8x256xf32, #tpu.memory_space<vmem>>) attributes {dimension_semantics = [#tpu.dimension_semantics<parallel>], iteration_bounds = array<i64: 1>, scalar_prefetch = 0 : i64, scratch_operands = 0 : i64, tpu.core_type = #tpu.core_type<tc>, window_params = [{transform_indices = @transform_0, window_bounds = array<i64: 1>}, {transform_indices = @transform_1, window_bounds = array<i64: 8, 128>}, {transform_indices = @transform_2, window_bounds = array<i64: 8, 256>}, {pipeline_mode = #tpu.pipeline_mode<synchronous>, transform_indices = @transform_3, window_bounds = array<i64: 128, 256>}, {transform_indices = @transform_4, window_bounds = array<i64: 8, 256>}]} {
    %c0 = arith.constant 0 : index
    %c0_0 = arith.constant 0 : index
    %0 = vector.load %arg3[%c0, %c0_0] : memref<8x256xf32, #tpu.memory_space<vmem>>, vector<8x256xf32>
    %c0_1 = arith.constant 0 : index
    %c0_2 = arith.constant 0 : index
    %1 = vector.load %arg4[%c0_1, %c0_2] : memref<128x256xf32, #tpu.memory_space<vmem>>, vector<128x256xf32>
    %cst = arith.constant dense<0.000000e+00> : vector<8x128xf32>
    %2 = tpu.matmul %0, %1, %cst {dimension_numbers = #tpu.dot_dimension_numbers<[1], [1], [0], [0], [0, 0, 1, 0], [], []>} : vector<8x256xf32>, vector<128x256xf32>, vector<8x128xf32> -> vector<8x128xf32>
    %c0_3 = arith.constant 0 : index
    %c0_4 = arith.constant 0 : index
    %3 = vector.load %arg2[%c0_3, %c0_4] : memref<8x128xf32, #tpu.memory_space<vmem>>, vector<8x128xf32>
    %4 = arith.subf %2, %3 : vector<8x128xf32>
    %c0_5 = arith.constant 0 : index
    %5 = memref.load %arg1[%c0_5] : memref<1xf32, #tpu.memory_space<smem>>
    %6 = vector.broadcast %5 : f32 to vector<8x128xf32>
    %7 = arith.mulf %6, %4 : vector<8x128xf32>
    %cst_6 = arith.constant dense<0.000000e+00> : vector<8x256xf32>
    %8 = tpu.matmul %7, %1, %cst_6 {dimension_numbers = #tpu.dot_dimension_numbers<[1], [0], [0], [1], [0, 0, 1, 1], [], []>} : vector<8x128xf32>, vector<128x256xf32>, vector<8x256xf32> -> vector<8x256xf32>
    %9 = arith.subf %0, %8 : vector<8x256xf32>
    %c0_7 = arith.constant 0 : index
    %c0_8 = arith.constant 0 : index
    %10 = vector.load %arg5[%c0_7, %c0_8] : memref<8x256xf32, #tpu.memory_space<vmem>>, vector<8x256xf32>
    tpu.vector_store %arg5[%c0_7, %c0_8], %9 {strides = array<i32>} : memref<8x256xf32, #tpu.memory_space<vmem>>, vector<8x256xf32>,
    return
  }
  func.func @transform_0(%arg0: i32) -> i32 {
    %c0_i32 = arith.constant 0 : i32
    %c0_i32_0 = arith.constant 0 : i32
    return %c0_i32 : i32
  }
  func.func @transform_1(%arg0: i32) -> (i32, i32) {
    %c0_i32 = arith.constant 0 : i32
    %c0_i32_0 = arith.constant 0 : i32
    return %arg0, %c0_i32 : i32, i32
  }
  func.func @transform_2(%arg0: i32) -> (i32, i32) {
    %c0_i32 = arith.constant 0 : i32
    %c0_i32_0 = arith.constant 0 : i32
    return %arg0, %c0_i32 : i32, i32
  }
  func.func @transform_3(%arg0: i32) -> (i32, i32) {
    %c0_i32 = arith.constant 0 : i32
    %c0_i32_0 = arith.constant 0 : i32
    %c0_i32_1 = arith.constant 0 : i32
    return %c0_i32, %c0_i32_0 : i32, i32
  }
  func.func @transform_4(%arg0: i32) -> (i32, i32) {
    %c0_i32 = arith.constant 0 : i32
    %c0_i32_0 = arith.constant 0 : i32
    return %arg0, %c0_i32 : i32, i32
  }
}

</mosaic_0001>

<llo_original>
// kernel: gradient_step.1
$region0: #{gradient_step.1}
  #allocation0 [shape = 'u32[]', space=smem, size = 0x4, offset = 0x4, fixed_abs, tag = 'smem constant byte address 0x4 - core index']
  #allocation1 [shape = 'u32[144,128]{1,0:T(1,128)}', space=vmem, size = 0x12000, scoped, tag = 'internal scratch']
  #allocation2 [shape = 'f32[1]{0:T(128)S(6)}', space=smem, size = 0x200, scoped, tag = 'scoped memory for gradient_step.1']
  %s0 = inlined_call_operand.<no memory space> [shape: f32[1], index: 0, kind: input, shape index: {}]
  %s1 = inlined_call_operand.hbm [shape: f32[8,128], index: 1, kind: input, shape index: {}]
  %s2 = inlined_call_operand.hbm [shape: f32[8,256], index: 2, kind: input, shape index: {}]
  %s3 = inlined_call_operand.hbm [shape: f32[128,256], index: 3, kind: input, shape index: {}]
  %s4 = inlined_call_operand.hbm [shape: f32[8,256], index: 4, kind: output, shape index: {}]
  %s5 = sld [smem:[#allocation0]]
  $region38: #{gradient_step.1} parent=0
    _
  %s7 = ssub.s32 1, %s5
  %s8 = scalar_select 0, %s7, %s5
  %9 = sst [smem:[#allocation2]] %s0
  $region1: #{gradient_step.1} parent=0
    #allocation3 [shape = 'u8[4096]{0}', space=vmem, size = 0x1000, scoped, tag = 'input window, operand 1, single buffered']
    #allocation4 [shape = 's32[1]{0}', space=sflag, size = 0x4, scoped, tag = 'scoped memory for gradient_step.1']
    #allocation5 [shape = 's32[1]{0}', space=sflag, size = 0x4, scoped, tag = 'scoped memory for gradient_step.1']
    #allocation6 [shape = 'u8[8192]{0}', space=vmem, size = 0x2000, scoped, tag = 'input window, operand 2, single buffered']
    #allocation7 [shape = 's32[1]{0}', space=sflag, size = 0x4, scoped, tag = 'scoped memory for gradient_step.1']
    #allocation8 [shape = 'u8[131072]{0}', space=vmem, size = 0x20000, scoped, tag = 'input window, operand 3, single buffered']
    #allocation9 [shape = 'u8[8192]{0}', space=vmem, size = 0x2000, scoped, tag = 'output window, operand 0, single buffered']
    %10 = vsyncpa [#allocation4], 0
    %11 = vsyncpa [#allocation7], 0
    %12 = vsyncpa [#allocation5], 0
    // Predicated region
    $region2: #{gradient_step.1} parent=1 // pred_check
      _
    $region3: #{gradient_step.1} parent=1 // pred_check_branch
      %14 = sbr.rel (0) target = $region5
    $region4: #{gradient_step.1} parent=1 // pred_region
      _
    $region5: #{gradient_step.1} parent=1 // pred_fallthru
      _
    // Predicated region
    $region6: #{gradient_step.1} parent=1 // pred_check
      _
    $region7: #{gradient_step.1} parent=1 // pred_check_branch
      %16 = sbr.rel (0) target = $region9
    $region8: #{gradient_step.1} parent=1 // pred_region
      %s18 = ssub.s32 128, 128
      %19 = vsyncadd [#allocation4], %s18
      %s21 = sshll.u32 [#allocation3], 4
      %s22 = int_to_ptr.vmem [resolvable:$true] %s21
      %24 = dma.hbm_to_vmem [thread:$0]  %s1, 128, %s22, [#allocation4]
    $region9: #{gradient_step.1} parent=1 // pred_fallthru
      _
    // Predicated region
    $region10: #{gradient_step.1} parent=1 // pred_check
      _
    $region11: #{gradient_step.1} parent=1 // pred_check_branch
      %26 = sbr.rel (0) target = $region13
    $region12: #{gradient_step.1} parent=1 // pred_region
      %s28 = ssub.s32 256, 256
      %29 = vsyncadd [#allocation7], %s28
      %s31 = sshll.u32 [#allocation6], 4
      %s32 = int_to_ptr.vmem [resolvable:$true] %s31
      %34 = dma.hbm_to_vmem [thread:$0]  %s2, 256, %s32, [#allocation7]
    $region13: #{gradient_step.1} parent=1 // pred_fallthru
      _
    // Predicated region
    $region14: #{gradient_step.1} parent=1 // pred_check
      _
    $region15: #{gradient_step.1} parent=1 // pred_check_branch
      %36 = sbr.rel (0) target = $region17
    $region16: #{gradient_step.1} parent=1 // pred_region
      %s38 = ssub.s32 4096, 4096
      %39 = vsyncadd [#allocation7], %s38
      %s40 = sshll.u32 [#allocation8], 4
      %s41 = int_to_ptr.vmem [resolvable:$true] %s40
      %46 = dma.hbm_to_vmem [thread:$0]  %s3, 4096, %s41, [#allocation7], 256, 256, 16
    $region17: #{gradient_step.1} parent=1 // pred_fallthru
      _
    // Predicated region
    $region18: #{gradient_step.1} parent=1 // pred_check
      _
    $region19: #{gradient_step.1} parent=1 // pred_check_branch
      %48 = sbr.rel (0) target = $region21
    $region20: #{gradient_step.1} parent=1 // pred_region
      %49 = dma.done [#allocation4], 128
    $region21: #{gradient_step.1} parent=1 // pred_fallthru
      _
    // Predicated region
    $region22: #{gradient_step.1} parent=1 // pred_check
      _
    $region23: #{gradient_step.1} parent=1 // pred_check_branch
      %51 = sbr.rel (0) target = $region25
    $region24: #{gradient_step.1} parent=1 // pred_region
      %52 = dma.done [#allocation7], 256
    $region25: #{gradient_step.1} parent=1 // pred_fallthru
      _
    // Predicated region
    $region26: #{gradient_step.1} parent=1 // pred_check
      _
    $region27: #{gradient_step.1} parent=1 // pred_check_branch
      %54 = sbr.rel (0) target = $region29
    $region28: #{gradient_step.1} parent=1 // pred_region
      %55 = dma.done [#allocation7], 4096
    $region29: #{gradient_step.1} parent=1 // pred_fallthru
      _
    %v56 = vld [vmem:[#allocation6] sm:$0xff]
    %v57 = vld [vmem:[#allocation6 + $0x8] sm:$0xff]
    %v58 = vld [vmem:[#allocation8] sm:$0xff]
    %v59 = vld [vmem:[#allocation8 + $0x8] sm:$0xff]
    %v60 = vld [vmem:[#allocation8 + $0x10] sm:$0xff]
    %v61 = vld [vmem:[#allocation8 + $0x18] sm:$0xff]
    %v62 = vld [vmem:[#allocation8 + $0x20] sm:$0xff]
    %v63 = vld [vmem:[#allocation8 + $0x28] sm:$0xff]
    %v64 = vld [vmem:[#allocation8 + $0x30] sm:$0xff]
    %v65 = vld [vmem:[#allocation8 + $0x38] sm:$0xff]
    %v66 = vld [vmem:[#allocation8 + $0x40] sm:$0xff]
    %v67 = vld [vmem:[#allocation8 + $0x48] sm:$0xff]
    %v68 = vld [vmem:[#allocation8 + $0x50] sm:$0xff]
    %v69 = vld [vmem:[#allocation8 + $0x58] sm:$0xff]
    %v70 = vld [vmem:[#allocation8 + $0x60] sm:$0xff]
    %v71 = vld [vmem:[#allocation8 + $0x68] sm:$0xff]
    %v72 = vld [vmem:[#allocation8 + $0x70] sm:$0xff]
    %v73 = vld [vmem:[#allocation8 + $0x78] sm:$0xff]
    %v74 = vld [vmem:[#allocation8 + $0x80] sm:$0xff]
    %v75 = vld [vmem:[#allocation8 + $0x88] sm:$0xff]
    %v76 = vld [vmem:[#allocation8 + $0x90] sm:$0xff]
    %v77 = vld [vmem:[#allocation8 + $0x98] sm:$0xff]
    %v78 = vld [vmem:[#allocation8 + $0xa0] sm:$0xff]
    %v79 = vld [vmem:[#allocation8 + $0xa8] sm:$0xff]
    %v80 = vld [vmem:[#allocation8 + $0xb0] sm:$0xff]
    %v81 = vld [vmem:[#allocation8 + $0xb8] sm:$0xff]
    %v82 = vld [vmem:[#allocation8 + $0xc0] sm:$0xff]
    %v83 = vld [vmem:[#allocation8 + $0xc8] sm:$0xff]
    %v84 = vld [vmem:[#allocation8 + $0xd0] sm:$0xff]
    %v85 = vld [vmem:[#allocation8 + $0xd8] sm:$0xff]
    %v86 = vld [vmem:[#allocation8 + $0xe0] sm:$0xff]
    %v87 = vld [vmem:[#allocation8 + $0xe8] sm:$0xff]
    %v88 = vld [vmem:[#allocation8 + $0xf0] sm:$0xff]
    %v89 = vld [vmem:[#allocation8 + $0xf8] sm:$0xff]
    %90 = vmatprep.subr.mxu0 %v89
    %91 = vmatpush1.xpose.msra.mxu0 %v88
    %92 = vmatprep.subr.mxu0 %v87
    %93 = vmatpush1.xpose.msra.mxu0 %v86
    %94 = vmatprep.subr.mxu0 %v85
    %95 = vmatpush1.xpose.msra.mxu0 %v84
    %96 = vmatprep.subr.mxu0 %v83
    %97 = vmatpush1.xpose.msra.mxu0 %v82
    %98 = vmatprep.subr.mxu0 %v81
    %99 = vmatpush1.xpose.msra.mxu0 %v80
    %100 = vmatprep.subr.mxu0 %v79
    %101 = vmatpush1.xpose.msra.mxu0 %v78
    %102 = vmatprep.subr.mxu0 %v77
    %103 = vmatpush1.xpose.msra.mxu0 %v76
    %104 = vmatprep.subr.mxu0 %v75
    %105 = vmatpush1.xpose.msra.mxu0 %v74
    %106 = vmatprep.subr.mxu0 %v73
    %107 = vmatpush1.xpose.msra.mxu0 %v72
    %108 = vmatprep.subr.mxu0 %v71
    %109 = vmatpush1.xpose.msra.mxu0 %v70
    %110 = vmatprep.subr.mxu0 %v69
    %111 = vmatpush1.xpose.msra.mxu0 %v68
    %112 = vmatprep.subr.mxu0 %v67
    %113 = vmatpush1.xpose.msra.mxu0 %v66
    %114 = vmatprep.subr.mxu0 %v65
    %115 = vmatpush1.xpose.msra.mxu0 %v64
    %116 = vmatprep.subr.mxu0 %v63
    %117 = vmatpush1.xpose.msra.mxu0 %v62
    %118 = vmatprep.subr.mxu0 %v61
    %119 = vmatpush1.xpose.msra.mxu0 %v60
    %120 = vmatprep.subr.mxu0 %v59
    %121 = vmatpush1.xpose.msra.mxu0 %v58
    %122 = vmatprep.subr.mxu0 0.0
    %123 = vmatpush2.xpose.msra.mxu0 0.0
    %124 = vmatprep.subr.mxu0 0.0
    %125 = vmatpush2.xpose.msra.mxu0 0.0
    %126 = vmatprep.subr.mxu0 0.0
    %127 = vmatpush2.xpose.msra.mxu0 0.0
    %128 = vmatprep.subr.mxu0 0.0
    %129 = vmatpush2.xpose.msra.mxu0 0.0
    %130 = vmatprep.subr.mxu0 0.0
    %131 = vmatpush2.xpose.msra.mxu0 0.0
    %132 = vmatprep.subr.mxu0 0.0
    %133 = vmatpush2.xpose.msra.mxu0 0.0
    %134 = vmatprep.subr.mxu0 0.0
    %135 = vmatpush2.xpose.msra.mxu0 0.0
    %136 = vmatprep.subr.mxu0 0.0
    %137 = vmatpush2.xpose.msra.mxu0 0.0
    %138 = vmatprep.subr.mxu0 0.0
    %139 = vmatpush2.xpose.msra.mxu0 0.0
    %140 = vmatprep.subr.mxu0 0.0
    %141 = vmatpush2.xpose.msra.mxu0 0.0
    %142 = vmatprep.subr.mxu0 0.0
    %143 = vmatpush2.xpose.msra.mxu0 0.0
    %144 = vmatprep.subr.mxu0 0.0
    %145 = vmatpush2.xpose.msra.mxu0 0.0
    %146 = vmatprep.subr.mxu0 0.0
    %147 = vmatpush2.xpose.msra.mxu0 0.0
    %148 = vmatprep.subr.mxu0 0.0
    %149 = vmatpush2.xpose.msra.mxu0 0.0
    %150 = vmatprep.subr.mxu0 0.0
    %151 = vmatpush2.xpose.msra.mxu0 0.0
    %152 = vmatprep.subr.mxu0 0.0
    %153 = vmatpush2.xpose.msra.mxu0 0.0
    %154 = vmatprep.mubr.f32.mxu0 %v57
    %155 = vmatmul.mubr.f32.gmra.mxu0 %v56
    %v156 = vpop.f32.mrf.mxu0
    %v157 = vadd.f32 0.0, %v156
    %v158 = vpop.f32.mrf.mxu0
    %159 = vdwg.mxu0
    %v160 = vld [vmem:[#allocation3] sm:$0xff]
    %v161 = vsub.f32 %v157, %v160
    %s162 = sld [smem:[#allocation2]]
    %v163 = vstv %s162
    %v164 = vmul.f32 %v163, %v161
    %165 = vmatprep.subr.mxu0 %v89
    %166 = vmatpush1.msra.mxu0 %v88
    %167 = vmatprep.subr.mxu0 %v87
    %168 = vmatpush1.msra.mxu0 %v86
    %169 = vmatprep.subr.mxu0 %v85
    %170 = vmatpush1.msra.mxu0 %v84
    %171 = vmatprep.subr.mxu0 %v83
    %172 = vmatpush1.msra.mxu0 %v82
    %173 = vmatprep.subr.mxu0 %v81
    %174 = vmatpush1.msra.mxu0 %v80
    %175 = vmatprep.subr.mxu0 %v79
    %176 = vmatpush1.msra.mxu0 %v78
    %177 = vmatprep.subr.mxu0 %v77
    %178 = vmatpush1.msra.mxu0 %v76
    %179 = vmatprep.subr.mxu0 %v75
    %180 = vmatpush1.msra.mxu0 %v74
    %181 = vmatprep.subr.mxu0 %v73
    %182 = vmatpush1.msra.mxu0 %v72
    %183 = vmatprep.subr.mxu0 %v71
    %184 = vmatpush1.msra.mxu0 %v70
    %185 = vmatprep.subr.mxu0 %v69
    %186 = vmatpush1.msra.mxu0 %v68
    %187 = vmatprep.subr.mxu0 %v67
    %188 = vmatpush1.msra.mxu0 %v66
    %189 = vmatprep.subr.mxu0 %v65
    %190 = vmatpush1.msra.mxu0 %v64
    %191 = vmatprep.subr.mxu0 %v63
    %192 = vmatpush1.msra.mxu0 %v62
    %193 = vmatprep.subr.mxu0 %v61
    %194 = vmatpush1.msra.mxu0 %v60
    %195 = vmatprep.subr.mxu0 %v59
    %196 = vmatpush1.msra.mxu0 %v58
    %197 = vmatprep.subr.mxu0 0.0
    %198 = vmatpush2.msra.mxu0 0.0
    %199 = vmatprep.subr.mxu0 0.0
    %200 = vmatpush2.msra.mxu0 0.0
    %201 = vmatprep.subr.mxu0 0.0
    %202 = vmatpush2.msra.mxu0 0.0
    %203 = vmatprep.subr.mxu0 0.0
    %204 = vmatpush2.msra.mxu0 0.0
    %205 = vmatprep.subr.mxu0 0.0
    %206 = vmatpush2.msra.mxu0 0.0
    %207 = vmatprep.subr.mxu0 0.0
    %208 = vmatpush2.msra.mxu0 0.0
    %209 = vmatprep.subr.mxu0 0.0
    %210 = vmatpush2.msra.mxu0 0.0
    %211 = vmatprep.subr.mxu0 0.0
    %212 = vmatpush2.msra.mxu0 0.0
    %213 = vmatprep.subr.mxu0 0.0
    %214 = vmatpush2.msra.mxu0 0.0
    %215 = vmatprep.subr.mxu0 0.0
    %216 = vmatpush2.msra.mxu0 0.0
    %217 = vmatprep.subr.mxu0 0.0
    %218 = vmatpush2.msra.mxu0 0.0
    %219 = vmatprep.subr.mxu0 0.0
    %220 = vmatpush2.msra.mxu0 0.0
    %221 = vmatprep.subr.mxu0 0.0
    %222 = vmatpush2.msra.mxu0 0.0
    %223 = vmatprep.subr.mxu0 0.0
    %224 = vmatpush2.msra.mxu0 0.0
    %225 = vmatprep.subr.mxu0 0.0
    %226 = vmatpush2.msra.mxu0 0.0
    %227 = vmatprep.subr.mxu0 0.0
    %228 = vmatpush2.msra.mxu0 0.0
    %229 = vmatprep.mubr.f32.mxu0 0.0
    %230 = vmatmul.mubr.f32.gmra.mxu0 %v164
    %v231 = vpop.f32.mrf.mxu0
    %v232 = vadd.f32 0.0, %v231
    %v233 = vpop.f32.mrf.mxu0
    %v234 = vadd.f32 0.0, %v233
    %235 = vdwg.mxu0
    %v236 = vsub.f32 %v56, %v232
    %v237 = vsub.f32 %v57, %v234
    %238 = vst [vmem:[#allocation9] sm:$0xff] %v236
    %239 = vst [vmem:[#allocation9 + $0x8] sm:$0xff] %v237
    // Predicated region
    $region30: #{gradient_step.1} parent=1 // pred_check
      _
    $region31: #{gradient_step.1} parent=1 // pred_check_branch
      %241 = sbr.rel (0) target = $region33
    $region32: #{gradient_step.1} parent=1 // pred_region
      %s243 = ssub.s32 256, 256
      %244 = vsyncadd [#allocation5], %s243
      %s246 = sshll.u32 [#allocation9], 4
      %s247 = int_to_ptr.vmem [resolvable:$true] %s246
      %249 = dma.vmem_to_hbm [thread:$0]  %s247, 256, %s4, [#allocation5]
    $region33: #{gradient_step.1} parent=1 // pred_fallthru
      _
    // Predicated region
    $region34: #{gradient_step.1} parent=1 // pred_check
      _
    $region35: #{gradient_step.1} parent=1 // pred_check_branch
      %251 = sbr.rel (0) target = $region37
    $region36: #{gradient_step.1} parent=1 // pred_region
      %252 = dma.done [#allocation5], 256
    $region37: #{gradient_step.1} parent=1 // pred_fallthru
      _
    %253 = vsyncpa [#allocation4], 1
    %254 = vsyncpa [#allocation7], 1
    %255 = vsyncpa [#allocation5], 1

</llo_original>
